<compile_context>
chip_gen: v7x
topology: tpu7x:2x2x1
jax: 0.10.0
libtpu: 0.0.40
codegen_flags: <defaults>
</compile_context>

<pallas_src>
import functools

import jax
import jax.numpy as jnp
from jax import lax
from jax.experimental import pallas as pl
from jax.experimental.pallas import tpu as pltpu


def _bsq_kernel(z_ref, zq_ref, bits_ref, gsum_ref, psum_ref, *,
                q_scale, logit_scale, h_coef, c_coef, hw, tcol):
    """One (TR, TCOL) block of the flattened (B*C, H*W) tensor.

    z_ref    : (TR, TCOL) input block
    zq_ref   : (TR, TCOL) quantized output (bf16 when q_scale == 1.0)
    bits_ref : (TR, TCOL) int8 code bits (z > 0)
    gsum_ref : (TR, 1) per-row sum of beta*diff^2 + (zeta*gamma0/inv_t)*H
    psum_ref : (TR, 1) per-row sum of p_plus (for avg_prob / codebook entropy)
    """
    j = pl.program_id(1)

    @pl.when(j == 0)
    def _init():
        gsum_ref[...] = jnp.zeros_like(gsum_ref)
        psum_ref[...] = jnp.zeros_like(psum_ref)

    z = z_ref[...].astype(jnp.float32)

    pos = z > 0
    qs = jnp.float32(q_scale)
    zq = jnp.where(pos, qs, -qs)              # forward value of straight-through quantize (scaled)
    zq_ref[...] = zq.astype(zq_ref.dtype)
    bits_ref[...] = pos.astype(jnp.int8)

    # Soft per-sample entropy (group_size == 1):
    #   p_plus = sigmoid(a), a = 4 * inv_t * q_scale * z
    #   H(p)   = softplus(-|a|) + |a| * sigmoid(-|a|)
    a = jnp.float32(logit_scale) * z
    b = jnp.abs(a)
    e = jnp.exp(-b)                           # in (0, 1]
    one_p_e = 1.0 + e
    r = 1.0 / one_p_e                         # sigmoid(|a|)
    er = e * r                                # sigmoid(-|a|) = min(p, 1-p)
    p_plus = jnp.where(a >= 0, r, er)
    h = jnp.log(one_p_e) + b * er             # exact binary entropy per element

    diff = zq - z
    # Commit and per-sample entropy enter the loss linearly with trace-time
    # coefficients, so accumulate a single combined per-element partial.
    g = jnp.float32(c_coef) * (diff * diff) + jnp.float32(h_coef) * h

    if hw % tcol != 0:                        # static: mask ragged lane tail only when needed
        col = j * tcol + lax.broadcasted_iota(jnp.int32, z.shape, 1)
        valid = col < hw
        g = jnp.where(valid, g, 0.0)
        p_plus = jnp.where(valid, p_plus, 0.0)

    gsum_ref[...] = gsum_ref[...] + jnp.sum(g, axis=1, keepdims=True)
    psum_ref[...] = psum_ref[...] + jnp.sum(p_plus, axis=1, keepdims=True)


def _choose_tiles(bc, hw, target_block_bytes):
    """Pick (TR, TCOL): ~target_block_bytes of f32 per input block, lane-dense."""
    target_elems = max(8 * 128, target_block_bytes // 4)
    if hw <= target_elems // 8:
        tcol = hw                              # full spatial extent on the lane axis
    else:
        tcol = max(128, (target_elems // 8) // 128 * 128)
    tr = max(1, target_elems // tcol)
    if tr >= bc:
        tr = bc                                # full extent (always legal)
    else:
        tr = max(8, (tr // 8) * 8)             # sublane multiple
    return tr, tcol


def bsq_forward(z_nchw, *, embed_dim, beta=0.25, gamma0=1.0, gamma=1.0,
                zeta=1.0, inv_temperature=1.0, l2_norm=False,
                target_block_bytes=2 * 1024 * 1024):
    """Pallas implementation of BinarySphericalQuantizer.forward (bchw input)."""
    B, C, H, W = z_nchw.shape
    assert C == embed_dim, f"expected embed_dim={embed_dim}, got C={C}"
    bc, hw = B * C, H * W
    n_tok = B * H * W

    q_scale = 1.0 / (embed_dim ** 0.5) if l2_norm else 1.0
    # zq payload is exactly +-q_scale; emit bf16 only when that is exact in bf16.
    zq_dtype = jnp.bfloat16 if q_scale == 1.0 else jnp.float32

    z2d = z_nchw.reshape(bc, hw)               # zero-copy NCHW view; no transpose

    tr, tcol = _choose_tiles(bc, hw, target_block_bytes)
    grid = (pl.cdiv(bc, tr), pl.cdiv(hw, tcol))

    kernel = functools.partial(
        _bsq_kernel,
        q_scale=q_scale,
        logit_scale=4.0 * inv_temperature * q_scale,
        h_coef=zeta * gamma0 / inv_temperature,
        c_coef=beta,
        hw=hw, tcol=tcol)

    zq2d, bits2d, gsum, psum = pl.pallas_call(
        kernel,
        grid=grid,
        in_specs=[pl.BlockSpec((tr, tcol), lambda i, j: (i, j))],
        out_specs=(
            pl.BlockSpec((tr, tcol), lambda i, j: (i, j)),
            pl.BlockSpec((tr, tcol), lambda i, j: (i, j)),
            pl.BlockSpec((tr, 1), lambda i, j: (i, 0)),   # resident across j
            pl.BlockSpec((tr, 1), lambda i, j: (i, 0)),   # resident across j
        ),
        out_shape=(
            jax.ShapeDtypeStruct((bc, hw), zq_dtype),
            jax.ShapeDtypeStruct((bc, hw), jnp.int8),
            jax.ShapeDtypeStruct((bc, 1), jnp.float32),
            jax.ShapeDtypeStruct((bc, 1), jnp.float32),
        ),
        compiler_params=pltpu.CompilerParams(
            dimension_semantics=("parallel", "arbitrary"),
            vmem_limit_bytes=32 * 1024 * 1024),
    )(z2d)

    # --- O(B*C + C) finalization glue --------------------------------------
    inv_tok = 1.0 / float(n_tok)
    loss_partial = jnp.sum(gsum) * inv_tok          # beta*commit_mean + (zeta*g0/inv_t)*persample_H
    avg_p_plus = psum[:, 0].reshape(B, C).sum(0) * inv_tok          # (C,)
    avg_prob = jnp.stack([1.0 - avg_p_plus, avg_p_plus], axis=-1)   # (C, 2): [-1, +1] codebook order
    cb_entropy = jnp.sum(-(avg_prob * jnp.log(avg_prob + 1e-8)))
    loss = loss_partial - (zeta * gamma / inv_temperature) * cb_entropy

    zq_out = zq2d.reshape(B, C, H, W)                               # NCHW, like the module
    zq_compress = jnp.transpose(bits2d.reshape(B, C, H, W),
                                (0, 2, 3, 1)).astype(jnp.bool_)     # BHWC bool (cheap int8 transpose)

    aux = {
        'H': cb_entropy,
        'used_codes': None,
        'indices': None,
        'group_indices': None,
        'avg_prob': avg_prob,
        'zq_compress': zq_compress,
    }
    return zq_out, loss, aux


def _reference_forward(z_nchw, *, embed_dim, beta, gamma0, gamma, zeta,
                       inv_temperature, l2_norm):
    """Pure-JAX reference mirroring the PyTorch module (soft-entropy path)."""
    z = jnp.transpose(z_nchw, (0, 2, 3, 1)).astype(jnp.float32)
    zhat = jnp.where(z > 0, 1.0, -1.0)
    q_scale = 1.0 / (embed_dim ** 0.5) if l2_norm else 1.0
    zq_compress = z > 0                                             # ((zq+1)//2).bool()

    p_plus = jax.nn.sigmoid(4.0 * inv_temperature * q_scale * z)
    p_minus = jax.nn.sigmoid(-4.0 * inv_temperature * q_scale * z)
    prob = jnp.stack([p_minus, p_plus], axis=-1)                    # (..., C, 2)
    h = -(prob * jnp.log(prob + 1e-8)).sum(-1)                      # (..., C)
    persample_entropy = h.sum(-1).mean()
    avg_prob = prob.reshape(-1, embed_dim, 2).mean(0)               # (C, 2)
    cb_entropy = jnp.sum(-(avg_prob * jnp.log(avg_prob + 1e-8)))

    zq_scaled = zhat * q_scale
    commit_loss = beta * jnp.mean(((zq_scaled - z) ** 2).sum(-1))
    entropy_penalty = gamma0 * persample_entropy - gamma * cb_entropy
    loss = commit_loss + zeta * entropy_penalty / inv_temperature
    zq_out = jnp.transpose(zq_scaled, (0, 3, 1, 2))
    return zq_out, loss, cb_entropy, avg_prob, zq_compress


if __name__ == "__main__":
    key = jax.random.PRNGKey(0)

    # Small shapes consistent with the module: embed_dim = C = 16, group_size = 1
    B, C, H, W = 2, 16, 16, 16
    hparams = dict(embed_dim=C, beta=0.25, gamma0=1.0, gamma=1.0, zeta=1.0,
                   inv_temperature=1.0, l2_norm=False)

    z = jax.random.normal(key, (B, C, H, W), dtype=jnp.float32)

    zq, loss, aux = bsq_forward(z, **hparams)
    jax.block_until_ready((zq, loss, aux['avg_prob'], aux['zq_compress']))

    # correctness check against a pure-JAX reference of the PyTorch semantics
    zq_ref, loss_ref, cb_ref, avg_prob_ref, zqc_ref = _reference_forward(z, **hparams)
    assert jnp.allclose(zq.astype(jnp.float32), zq_ref), "zq mismatch"
    assert jnp.allclose(loss, loss_ref, atol=1e-5, rtol=1e-5), "loss mismatch"
    assert jnp.allclose(aux['H'], cb_ref, atol=1e-5, rtol=1e-5), "cb entropy mismatch"
    assert jnp.allclose(aux['avg_prob'], avg_prob_ref, atol=1e-5), "avg_prob mismatch"
    assert jnp.array_equal(aux['zq_compress'], zqc_ref), "zq_compress mismatch"

    print("KERNEL_OK")
</pallas_src>

<mosaic_0001>
module attributes {stable_mosaic.version = 11 : i64} {
  func.func @_bsq_kernel(%arg0: i32, %arg1: i32, %arg2: memref<32x256xf32, #tpu.memory_space<vmem>>, %arg3: memref<32x256xbf16, #tpu.memory_space<vmem>>, %arg4: memref<32x256xi8, #tpu.memory_space<vmem>>, %arg5: memref<32x1xf32, #tpu.memory_space<vmem>>, %arg6: memref<32x1xf32, #tpu.memory_space<vmem>>) attributes {dimension_semantics = [#tpu.dimension_semantics<parallel>, #tpu.dimension_semantics<arbitrary>], iteration_bounds = array<i64: 1, 1>, scalar_prefetch = 0 : i64, scratch_operands = 0 : i64, tpu.core_type = #tpu.core_type<tc>, window_params = [{transform_indices = @transform_0, window_bounds = array<i64: 32, 256>}, {transform_indices = @transform_1, window_bounds = array<i64: 32, 256>}, {transform_indices = @transform_2, window_bounds = array<i64: 32, 256>}, {transform_indices = @transform_3, window_bounds = array<i64: 32, 1>}, {transform_indices = @transform_4, window_bounds = array<i64: 32, 1>}]} {
    %c0_i32 = arith.constant 0 : i32
    %0 = arith.cmpi eq, %arg1, %c0_i32 : i32
    %1 = arith.extui %0 : i1 to i32
    %c0_i32_0 = arith.constant 0 : i32
    %2 = arith.cmpi ne, %1, %c0_i32_0 : i32
    scf.if %2 {
      %cst_26 = arith.constant 0.000000e+00 : f32
      %48 = vector.broadcast %cst_26 : f32 to vector<32x1xf32>
      %c0_27 = arith.constant 0 : index
      %c0_28 = arith.constant 0 : index
      %49 = vector.load %arg5[%c0_27, %c0_28] : memref<32x1xf32, #tpu.memory_space<vmem>>, vector<32x1xf32>
      tpu.vector_store %arg5[%c0_27, %c0_28], %48 {strides = array<i32>} : memref<32x1xf32, #tpu.memory_space<vmem>>, vector<32x1xf32>,
      %cst_29 = arith.constant 0.000000e+00 : f32
      %50 = vector.broadcast %cst_29 : f32 to vector<32x1xf32>
      %c0_30 = arith.constant 0 : index
      %c0_31 = arith.constant 0 : index
      %51 = vector.load %arg6[%c0_30, %c0_31] : memref<32x1xf32, #tpu.memory_space<vmem>>, vector<32x1xf32>
      tpu.vector_store %arg6[%c0_30, %c0_31], %50 {strides = array<i32>} : memref<32x1xf32, #tpu.memory_space<vmem>>, vector<32x1xf32>,
    } else {
    }
    %c0 = arith.constant 0 : index
    %c0_1 = arith.constant 0 : index
    %3 = vector.load %arg2[%c0, %c0_1] : memref<32x256xf32, #tpu.memory_space<vmem>>, vector<32x256xf32>
    %cst = arith.constant 0.000000e+00 : f32
    %4 = vector.broadcast %cst : f32 to vector<32x256xf32>
    %5 = arith.cmpf ogt, %3, %4 : vector<32x256xf32>
    %cst_2 = arith.constant 0.000000e+00 : f32
    %cst_3 = arith.constant 1.000000e+00 : f32
    %6 = arith.subf %cst_2, %cst_3 : f32
    %cst_4 = arith.constant 1.000000e+00 : f32
    %7 = vector.broadcast %cst_4 : f32 to vector<32x256xf32>
    %8 = vector.broadcast %6 : f32 to vector<32x256xf32>
    %9 = arith.select %5, %7, %8 : vector<32x256xi1>, vector<32x256xf32>
    %10 = arith.truncf %9 : vector<32x256xf32> to vector<32x256xbf16>
    %c0_5 = arith.constant 0 : index
    %c0_6 = arith.constant 0 : index
    %11 = vector.load %arg3[%c0_5, %c0_6] : memref<32x256xbf16, #tpu.memory_space<vmem>>, vector<32x256xbf16>
    tpu.vector_store %arg3[%c0_5, %c0_6], %10 {strides = array<i32>} : memref<32x256xbf16, #tpu.memory_space<vmem>>, vector<32x256xbf16>,
    %12 = arith.extui %5 : vector<32x256xi1> to vector<32x256xi8>
    %c0_7 = arith.constant 0 : index
    %c0_8 = arith.constant 0 : index
    %13 = vector.load %arg4[%c0_7, %c0_8] : memref<32x256xi8, #tpu.memory_space<vmem>>, vector<32x256xi8>
    tpu.vector_store %arg4[%c0_7, %c0_8], %12 {strides = array<i32>} : memref<32x256xi8, #tpu.memory_space<vmem>>, vector<32x256xi8>,
    %cst_9 = arith.constant 4.000000e+00 : f32
    %14 = vector.broadcast %cst_9 : f32 to vector<32x256xf32>
    %15 = arith.mulf %14, %3 : vector<32x256xf32>
    %16 = math.absf %15 : vector<32x256xf32>
    %cst_10 = arith.constant 0.000000e+00 : f32
    %17 = vector.broadcast %cst_10 : f32 to vector<32x256xf32>
    %18 = arith.subf %17, %16 : vector<32x256xf32>
    %19 = math.exp %18 : vector<32x256xf32>
    %cst_11 = arith.constant 1.000000e+00 : f32
    %20 = vector.broadcast %cst_11 : f32 to vector<32x256xf32>
    %21 = arith.addf %20, %19 : vector<32x256xf32>
    %cst_12 = arith.constant 1.000000e+00 : f32
    %22 = vector.broadcast %cst_12 : f32 to vector<32x256xf32>
    %23 = arith.divf %22, %21 : vector<32x256xf32>
    %24 = arith.mulf %19, %23 : vector<32x256xf32>
    %cst_13 = arith.constant 0.000000e+00 : f32
    %25 = vector.broadcast %cst_13 : f32 to vector<32x256xf32>
    %26 = arith.cmpf oge, %15, %25 : vector<32x256xf32>
    %27 = arith.select %26, %23, %24 : vector<32x256xi1>, vector<32x256xf32>
    %28 = math.log %21 : vector<32x256xf32>
    %29 = arith.mulf %16, %24 : vector<32x256xf32>
    %30 = arith.addf %28, %29 : vector<32x256xf32>
    %31 = arith.subf %9, %3 : vector<32x256xf32>
    %32 = arith.mulf %31, %31 : vector<32x256xf32>
    %cst_14 = arith.constant 2.500000e-01 : f32
    %33 = vector.broadcast %cst_14 : f32 to vector<32x256xf32>
    %34 = arith.mulf %33, %32 : vector<32x256xf32>
    %cst_15 = arith.constant 1.000000e+00 : f32
    %35 = vector.broadcast %cst_15 : f32 to vector<32x256xf32>
    %36 = arith.mulf %35, %30 : vector<32x256xf32>
    %37 = arith.addf %34, %36 : vector<32x256xf32>
    %c0_16 = arith.constant 0 : index
    %c0_17 = arith.constant 0 : index
    %38 = vector.load %arg5[%c0_16, %c0_17] : memref<32x1xf32, #tpu.memory_space<vmem>>, vector<32x1xf32>
    %cst_18 = arith.constant dense<0.000000e+00> : vector<32xf32>
    %39 = vector.multi_reduction <add>, %37, %cst_18 [1] : vector<32x256xf32> to vector<32xf32>
    %40 = vector.shape_cast %39 : vector<32xf32> to vector<32x1xf32>
    %41 = arith.addf %38, %40 : vector<32x1xf32>
    %c0_19 = arith.constant 0 : index
    %c0_20 = arith.constant 0 : index
    %42 = vector.load %arg5[%c0_19, %c0_20] : memref<32x1xf32, #tpu.memory_space<vmem>>, vector<32x1xf32>
    tpu.vector_store %arg5[%c0_19, %c0_20], %41 {strides = array<i32>} : memref<32x1xf32, #tpu.memory_space<vmem>>, vector<32x1xf32>,
    %c0_21 = arith.constant 0 : index
    %c0_22 = arith.constant 0 : index
    %43 = vector.load %arg6[%c0_21, %c0_22] : memref<32x1xf32, #tpu.memory_space<vmem>>, vector<32x1xf32>
    %cst_23 = arith.constant dense<0.000000e+00> : vector<32xf32>
    %44 = vector.multi_reduction <add>, %27, %cst_23 [1] : vector<32x256xf32> to vector<32xf32>
    %45 = vector.shape_cast %44 : vector<32xf32> to vector<32x1xf32>
    %46 = arith.addf %43, %45 : vector<32x1xf32>
    %c0_24 = arith.constant 0 : index
    %c0_25 = arith.constant 0 : index
    %47 = vector.load %arg6[%c0_24, %c0_25] : memref<32x1xf32, #tpu.memory_space<vmem>>, vector<32x1xf32>
    tpu.vector_store %arg6[%c0_24, %c0_25], %46 {strides = array<i32>} : memref<32x1xf32, #tpu.memory_space<vmem>>, vector<32x1xf32>,
    return
  }
  func.func @transform_0(%arg0: i32, %arg1: i32) -> (i32, i32) {
    %c0_i32 = arith.constant 0 : i32
    return %arg0, %arg1 : i32, i32
  }
  func.func @transform_1(%arg0: i32, %arg1: i32) -> (i32, i32) {
    %c0_i32 = arith.constant 0 : i32
    return %arg0, %arg1 : i32, i32
  }
  func.func @transform_2(%arg0: i32, %arg1: i32) -> (i32, i32) {
    %c0_i32 = arith.constant 0 : i32
    return %arg0, %arg1 : i32, i32
  }
  func.func @transform_3(%arg0: i32, %arg1: i32) -> (i32, i32) {
    %c0_i32 = arith.constant 0 : i32
    %c0_i32_0 = arith.constant 0 : i32
    return %arg0, %c0_i32 : i32, i32
  }
  func.func @transform_4(%arg0: i32, %arg1: i32) -> (i32, i32) {
    %c0_i32 = arith.constant 0 : i32
    %c0_i32_0 = arith.constant 0 : i32
    return %arg0, %c0_i32 : i32, i32
  }
}

</mosaic_0001>

<llo_original>
// kernel: tpu_custom_call.1
$region0: #{tpu_custom_call.1}
  #allocation0 [shape = 'u32[]', space=smem, size = 0x4, offset = 0x4, fixed_abs, tag = 'smem constant byte address 0x4 - core index']
  #allocation1 [shape = 'u32[144,128]{1,0:T(1,128)}', space=vmem, size = 0x12000, scoped, tag = 'internal scratch']
  %s0 = inlined_call_operand.hbm [shape: f32[32,256], index: 0, kind: input, shape index: {}]
  %s1 = inlined_call_operand.vmem [shape: bf16[32,256], index: 1, kind: output, shape index: {0}]
  %s2 = inlined_call_operand.hbm [shape: s8[32,256], index: 2, kind: output, shape index: {1}]
  %s3 = inlined_call_operand.vmem [shape: f32[32,1], index: 3, kind: output, shape index: {2}]
  %s4 = inlined_call_operand.vmem [shape: f32[32,1], index: 4, kind: output, shape index: {3}]
  %5 = xla_tuple %s1, %s2, %s3, %s4
  %s6 = sld [smem:[#allocation0]]
  $region46: #{tpu_custom_call.1} parent=0
    _
  %s8 = ssub.s32 1, %s6
  %s9 = scalar_select 0, %s8, %s6
  $region1: #{tpu_custom_call.1} parent=0
    #allocation2 [shape = 'u8[32768]{0}', space=vmem, size = 0x8000, scoped, tag = 'input window, operand 0, single buffered']
    #allocation3 [shape = 's32[1]{0}', space=sflag, size = 0x4, scoped, tag = 'scoped memory for tpu_custom_call.1']
    #allocation4 [shape = 's32[1]{0}', space=sflag, size = 0x4, scoped, tag = 'scoped memory for tpu_custom_call.1']
    #allocation5 [shape = 'u8[8192]{0}', space=vmem, size = 0x2000, scoped, tag = 'output window, operand 1, single buffered']
    %10 = vsyncpa [#allocation3], 0
    %11 = vsyncpa [#allocation4], 0
    // Predicated region
    $region2: #{tpu_custom_call.1} parent=1 // pred_check
      _
    $region3: #{tpu_custom_call.1} parent=1 // pred_check_branch
      %13 = sbr.rel (0) target = $region5
    $region4: #{tpu_custom_call.1} parent=1 // pred_region
      %s15 = ssub.s32 1024, 1024
      %16 = vsyncadd [#allocation3], %s15
      %s17 = sshll.u32 [#allocation2], 4
      %s18 = int_to_ptr.vmem [resolvable:$true] %s17
      %23 = dma.hbm_to_vmem [thread:$0]  %s0, 1024, %s18, [#allocation3], 256, 256, 16
    $region5: #{tpu_custom_call.1} parent=1 // pred_fallthru
      _
    // Predicated region
    $region6: #{tpu_custom_call.1} parent=1 // pred_check
      _
    $region7: #{tpu_custom_call.1} parent=1 // pred_check_branch
      %25 = sbr.rel (0) target = $region9
    $region8: #{tpu_custom_call.1} parent=1 // pred_region
      %26 = dma.done [#allocation3], 1024
    $region9: #{tpu_custom_call.1} parent=1 // pred_fallthru
      _
    %p29 = scmp.eq.s32.totalorder 0, 0
    // Predicated region
    $region10: #{tpu_custom_call.1} parent=1 // pred_check
      %p30 = pneg %p29
    $region11: #{tpu_custom_call.1} parent=1 // pred_check_branch
      %32 = sbr.rel (%p30) target = $region13
    $region12: #{tpu_custom_call.1} parent=1 // pred_region
      %vm33 = vcmask 7168
      %34 = vst.msk [vmem:[%s3] sm:$0xff] %vm33, 0.0
      %35 = vst.msk [vmem:[%s3 + $0x8] sm:$0xff] %vm33, 0.0
      %36 = vst.msk [vmem:[%s3 + $0x10] sm:$0xff] %vm33, 0.0
      %37 = vst.msk [vmem:[%s3 + $0x18] sm:$0xff] %vm33, 0.0
      %38 = vst.msk [vmem:[%s4] sm:$0xff] %vm33, 0.0
      %39 = vst.msk [vmem:[%s4 + $0x8] sm:$0xff] %vm33, 0.0
      %40 = vst.msk [vmem:[%s4 + $0x10] sm:$0xff] %vm33, 0.0
      %41 = vst.msk [vmem:[%s4 + $0x18] sm:$0xff] %vm33, 0.0
    $region13: #{tpu_custom_call.1} parent=1 // pred_fallthru
      _
    %v42 = vld [vmem:[#allocation2] sm:$0xff]
    %v43 = vld [vmem:[#allocation2 + $0x8] sm:$0xff]
    %v44 = vld [vmem:[#allocation2 + $0x10] sm:$0xff]
    %v45 = vld [vmem:[#allocation2 + $0x18] sm:$0xff]
    %v46 = vld [vmem:[#allocation2 + $0x20] sm:$0xff]
    %v47 = vld [vmem:[#allocation2 + $0x28] sm:$0xff]
    %v48 = vld [vmem:[#allocation2 + $0x30] sm:$0xff]
    %v49 = vld [vmem:[#allocation2 + $0x38] sm:$0xff]
    %vm50 = vcmp.gt.f32.partialorder %v42, 0.0
    %vm51 = vcmp.gt.f32.partialorder %v43, 0.0
    %vm52 = vcmp.gt.f32.partialorder %v44, 0.0
    %vm53 = vcmp.gt.f32.partialorder %v45, 0.0
    %vm54 = vcmp.gt.f32.partialorder %v46, 0.0
    %vm55 = vcmp.gt.f32.partialorder %v47, 0.0
    %vm56 = vcmp.gt.f32.partialorder %v48, 0.0
    %vm57 = vcmp.gt.f32.partialorder %v49, 0.0
    %v58 = vsel %vm50, 1.0, -1.0
    %v59 = vsel %vm51, 1.0, -1.0
    %v60 = vsel %vm52, 1.0, -1.0
    %v61 = vsel %vm53, 1.0, -1.0
    %v62 = vsel %vm54, 1.0, -1.0
    %v63 = vsel %vm55, 1.0, -1.0
    %v64 = vsel %vm56, 1.0, -1.0
    %v65 = vsel %vm57, 1.0, -1.0
    %v66 = vpack.c.bf16 %v60, %v58
    %v67 = vpack.c.bf16 %v61, %v59
    %v68 = vpack.c.bf16 %v64, %v62
    %v69 = vpack.c.bf16 %v65, %v63
    %70 = vst [vmem:[%s1] sm:$0xff] %v66
    %71 = vst [vmem:[%s1 + $0x8] sm:$0xff] %v67
    %72 = vst [vmem:[%s1 + $0x10] sm:$0xff] %v68
    %73 = vst [vmem:[%s1 + $0x18] sm:$0xff] %v69
    %vm74 = vmpackc.low %vm52, %vm50
    %vm75 = vmpackc.low %vm56, %vm54
    %vm76 = vmpackc.even %vm75, %vm74
    %vm77 = vmpackc.low %vm53, %vm51
    %vm78 = vmpackc.low %vm57, %vm55
    %vm79 = vmpackc.even %vm78, %vm77
    %v80 = vsel %vm76, 16843009, 0
    %v81 = vsel %vm79, 16843009, 0
    %82 = vst [vmem:[#allocation5] sm:$0xff] %v80
    %83 = vst [vmem:[#allocation5 + $0x8] sm:$0xff] %v81
    %v84 = vmul.f32 %v42, 4.0
    %v85 = vmul.f32 %v43, 4.0
    %v86 = vmul.f32 %v44, 4.0
    %v87 = vmul.f32 %v45, 4.0
    %v88 = vmul.f32 %v46, 4.0
    %v89 = vmul.f32 %v47, 4.0
    %v90 = vmul.f32 %v48, 4.0
    %v91 = vmul.f32 %v49, 4.0
    %v92 = vand.u32 2147483647, %v84
    %v93 = vand.u32 2147483647, %v85
    %v94 = vand.u32 2147483647, %v86
    %v95 = vand.u32 2147483647, %v87
    %v96 = vand.u32 2147483647, %v88
    %v97 = vand.u32 2147483647, %v89
    %v98 = vand.u32 2147483647, %v90
    %v99 = vand.u32 2147483647, %v91
    %v100 = vsub.f32 0.0, %v92
    %v101 = vsub.f32 0.0, %v93
    %v102 = vsub.f32 0.0, %v94
    %v103 = vsub.f32 0.0, %v95
    %v104 = vsub.f32 0.0, %v96
    %v105 = vsub.f32 0.0, %v97
    %v106 = vsub.f32 0.0, %v98
    %v107 = vsub.f32 0.0, %v99
    %v108 = vmul.f32 %v100, 1.442695
    %v109 = vpow.pop %v108
    %v110 = vmul.f32 %v101, 1.442695
    %v111 = vpow.pop %v110
    %v112 = vmul.f32 %v102, 1.442695
    %v113 = vpow.pop %v112
    %v114 = vmul.f32 %v103, 1.442695
    %v115 = vpow.pop %v114
    %v116 = vmul.f32 %v104, 1.442695
    %v117 = vpow.pop %v116
    %v118 = vmul.f32 %v105, 1.442695
    %v119 = vpow.pop %v118
    %v120 = vmul.f32 %v106, 1.442695
    %v121 = vpow.pop %v120
    %v122 = vmul.f32 %v107, 1.442695
    %v123 = vpow.pop %v122
    %v124 = vadd.f32 %v109, 1.0
    %v125 = vadd.f32 %v111, 1.0
    %v126 = vadd.f32 %v113, 1.0
    %v127 = vadd.f32 %v115, 1.0
    %v128 = vadd.f32 %v117, 1.0
    %v129 = vadd.f32 %v119, 1.0
    %v130 = vadd.f32 %v121, 1.0
    %v131 = vadd.f32 %v123, 1.0
    %v132 = vrcp.pop %v124
    %v133 = vmul.f32 1.0, %v132
    %v134 = vrcp.pop %v125
    %v135 = vmul.f32 1.0, %v134
    %v136 = vrcp.pop %v126
    %v137 = vmul.f32 1.0, %v136
    %v138 = vrcp.pop %v127
    %v139 = vmul.f32 1.0, %v138
    %v140 = vrcp.pop %v128
    %v141 = vmul.f32 1.0, %v140
    %v142 = vrcp.pop %v129
    %v143 = vmul.f32 1.0, %v142
    %v144 = vrcp.pop %v130
    %v145 = vmul.f32 1.0, %v144
    %v146 = vrcp.pop %v131
    %v147 = vmul.f32 1.0, %v146
    %v148 = vmul.f32 %v109, %v133
    %v149 = vmul.f32 %v111, %v135
    %v150 = vmul.f32 %v113, %v137
    %v151 = vmul.f32 %v115, %v139
    %v152 = vmul.f32 %v117, %v141
    %v153 = vmul.f32 %v119, %v143
    %v154 = vmul.f32 %v121, %v145
    %v155 = vmul.f32 %v123, %v147
    %vm156 = vcmp.ge.f32.partialorder %v84, 0.0
    %vm157 = vcmp.ge.f32.partialorder %v85, 0.0
    %vm158 = vcmp.ge.f32.partialorder %v86, 0.0
    %vm159 = vcmp.ge.f32.partialorder %v87, 0.0
    %vm160 = vcmp.ge.f32.partialorder %v88, 0.0
    %vm161 = vcmp.ge.f32.partialorder %v89, 0.0
    %vm162 = vcmp.ge.f32.partialorder %v90, 0.0
    %vm163 = vcmp.ge.f32.partialorder %v91, 0.0
    %v164 = vsel %vm156, %v133, %v148
    %v165 = vsel %vm157, %v135, %v149
    %v166 = vsel %vm158, %v137, %v150
    %v167 = vsel %vm159, %v139, %v151
    %v168 = vsel %vm160, %v141, %v152
    %v169 = vsel %vm161, %v143, %v153
    %v170 = vsel %vm162, %v145, %v154
    %v171 = vsel %vm163, %v147, %v155
    %v172 = vlog2.pop %v124
    %v173 = vmul.f32 %v172, 0.6931472
    %v174 = vlog2.pop %v125
    %v175 = vmul.f32 %v174, 0.6931472
    %v176 = vlog2.pop %v126
    %v177 = vmul.f32 %v176, 0.6931472
    %v178 = vlog2.pop %v127
    %v179 = vmul.f32 %v178, 0.6931472
    %v180 = vlog2.pop %v128
    %v181 = vmul.f32 %v180, 0.6931472
    %v182 = vlog2.pop %v129
    %v183 = vmul.f32 %v182, 0.6931472
    %v184 = vlog2.pop %v130
    %v185 = vmul.f32 %v184, 0.6931472
    %v186 = vlog2.pop %v131
    %v187 = vmul.f32 %v186, 0.6931472
    %v188 = vmul.f32 %v92, %v148
    %v189 = vmul.f32 %v93, %v149
    %v190 = vmul.f32 %v94, %v150
    %v191 = vmul.f32 %v95, %v151
    %v192 = vmul.f32 %v96, %v152
    %v193 = vmul.f32 %v97, %v153
    %v194 = vmul.f32 %v98, %v154
    %v195 = vmul.f32 %v99, %v155
    %v196 = vadd.f32 %v173, %v188
    %v197 = vadd.f32 %v175, %v189
    %v198 = vadd.f32 %v177, %v190
    %v199 = vadd.f32 %v179, %v191
    %v200 = vadd.f32 %v181, %v192
    %v201 = vadd.f32 %v183, %v193
    %v202 = vadd.f32 %v185, %v194
    %v203 = vadd.f32 %v187, %v195
    %v204 = vsub.f32 %v58, %v42
    %v205 = vsub.f32 %v59, %v43
    %v206 = vsub.f32 %v60, %v44
    %v207 = vsub.f32 %v61, %v45
    %v208 = vsub.f32 %v62, %v46
    %v209 = vsub.f32 %v63, %v47
    %v210 = vsub.f32 %v64, %v48
    %v211 = vsub.f32 %v65, %v49
    %v212 = vmul.f32 %v204, %v204
    %v213 = vmul.f32 %v205, %v205
    %v214 = vmul.f32 %v206, %v206
    %v215 = vmul.f32 %v207, %v207
    %v216 = vmul.f32 %v208, %v208
    %v217 = vmul.f32 %v209, %v209
    %v218 = vmul.f32 %v210, %v210
    %v219 = vmul.f32 %v211, %v211
    %v220 = vmul.f32 %v212, 0.25
    %v221 = vmul.f32 %v213, 0.25
    %v222 = vmul.f32 %v214, 0.25
    %v223 = vmul.f32 %v215, 0.25
    %v224 = vmul.f32 %v216, 0.25
    %v225 = vmul.f32 %v217, 0.25
    %v226 = vmul.f32 %v218, 0.25
    %v227 = vmul.f32 %v219, 0.25
    %v228 = vadd.f32 %v220, %v196
    %v229 = vadd.f32 %v221, %v197
    %v230 = vadd.f32 %v222, %v198
    %v231 = vadd.f32 %v223, %v199
    %v232 = vadd.f32 %v224, %v200
    %v233 = vadd.f32 %v225, %v201
    %v234 = vadd.f32 %v226, %v202
    %v235 = vadd.f32 %v227, %v203
    %v236 = vld [vmem:[%s3] sm:$0xff]
    %v237 = vld [vmem:[%s3 + $0x8] sm:$0xff]
    %v238 = vld [vmem:[%s3 + $0x10] sm:$0xff]
    %v239 = vld [vmem:[%s3 + $0x18] sm:$0xff]
    %v240 = vadd.f32 %v228, %v229
    %241 = vadd.xlane.f32.xlu0 %v240
    %v242 = vpop.xlane.xlu0 %241
    %v243 = vadd.f32 %v230, %v231
    %244 = vadd.xlane.f32.xlu0 %v243
    %v245 = vpop.xlane.xlu0 %244
    %v246 = vadd.f32 %v232, %v233
    %247 = vadd.xlane.f32.xlu0 %v246
    %v248 = vpop.xlane.xlu0 %247
    %v249 = vadd.f32 %v234, %v235
    %250 = vadd.xlane.f32.xlu0 %v249
    %v251 = vpop.xlane.xlu0 %250
    %v252 = vadd.f32 %v236, %v242
    %v253 = vadd.f32 %v237, %v245
    %v254 = vadd.f32 %v238, %v248
    %v255 = vadd.f32 %v239, %v251
    %vm256 = vcmask 7168
    %257 = vst.msk [vmem:[%s3] sm:$0xff] %vm256, %v252
    %258 = vst.msk [vmem:[%s3 + $0x8] sm:$0xff] %vm256, %v253
    %259 = vst.msk [vmem:[%s3 + $0x10] sm:$0xff] %vm256, %v254
    %260 = vst.msk [vmem:[%s3 + $0x18] sm:$0xff] %vm256, %v255
    %v261 = vld [vmem:[%s4] sm:$0xff]
    %v262 = vld [vmem:[%s4 + $0x8] sm:$0xff]
    %v263 = vld [vmem:[%s4 + $0x10] sm:$0xff]
    %v264 = vld [vmem:[%s4 + $0x18] sm:$0xff]
    %v265 = vadd.f32 %v164, %v165
    %266 = vadd.xlane.f32.xlu0 %v265
    %v267 = vpop.xlane.xlu0 %266
    %v268 = vadd.f32 %v166, %v167
    %269 = vadd.xlane.f32.xlu0 %v268
    %v270 = vpop.xlane.xlu0 %269
    %v271 = vadd.f32 %v168, %v169
    %272 = vadd.xlane.f32.xlu0 %v271
    %v273 = vpop.xlane.xlu0 %272
    %v274 = vadd.f32 %v170, %v171
    %275 = vadd.xlane.f32.xlu0 %v274
    %v276 = vpop.xlane.xlu0 %275
    %v277 = vadd.f32 %v261, %v267
    %v278 = vadd.f32 %v262, %v270
    %v279 = vadd.f32 %v263, %v273
    %v280 = vadd.f32 %v264, %v276
    %281 = vst.msk [vmem:[%s4] sm:$0xff] %vm256, %v277
    %282 = vst.msk [vmem:[%s4 + $0x8] sm:$0xff] %vm256, %v278
    %283 = vst.msk [vmem:[%s4 + $0x10] sm:$0xff] %vm256, %v279
    %284 = vst.msk [vmem:[%s4 + $0x18] sm:$0xff] %vm256, %v280
    // Predicated region
    $region14: #{tpu_custom_call.1} parent=1 // pred_check
      _
    $region15: #{tpu_custom_call.1} parent=1 // pred_check_branch
      %286 = sbr.rel (0) target = $region17
    $region16: #{tpu_custom_call.1} parent=1 // pred_region
      _
    $region17: #{tpu_custom_call.1} parent=1 // pred_fallthru
      _
    // Predicated region
    $region18: #{tpu_custom_call.1} parent=1 // pred_check
      _
    $region19: #{tpu_custom_call.1} parent=1 // pred_check_branch
      %288 = sbr.rel (0) target = $region21
    $region20: #{tpu_custom_call.1} parent=1 // pred_region
      %s290 = ssub.s32 256, 256
      %291 = vsyncadd [#allocation4], %s290
      %s293 = sshll.u32 [#allocation5], 4
      %s294 = int_to_ptr.vmem [resolvable:$true] %s293
      %296 = dma.vmem_to_hbm [thread:$0]  %s294, 256, %s2, [#allocation4]
    $region21: #{tpu_custom_call.1} parent=1 // pred_fallthru
      _
    // Predicated region
    $region22: #{tpu_custom_call.1} parent=1 // pred_check
      _
    $region23: #{tpu_custom_call.1} parent=1 // pred_check_branch
      %298 = sbr.rel (0) target = $region25
    $region24: #{tpu_custom_call.1} parent=1 // pred_region
      _
    $region25: #{tpu_custom_call.1} parent=1 // pred_fallthru
      _
    // Predicated region
    $region26: #{tpu_custom_call.1} parent=1 // pred_check
      _
    $region27: #{tpu_custom_call.1} parent=1 // pred_check_branch
      %300 = sbr.rel (0) target = $region29
    $region28: #{tpu_custom_call.1} parent=1 // pred_region
      _
    $region29: #{tpu_custom_call.1} parent=1 // pred_fallthru
      _
    // Predicated region
    $region30: #{tpu_custom_call.1} parent=1 // pred_check
      _
    $region31: #{tpu_custom_call.1} parent=1 // pred_check_branch
      %302 = sbr.rel (0) target = $region33
    $region32: #{tpu_custom_call.1} parent=1 // pred_region
      _
    $region33: #{tpu_custom_call.1} parent=1 // pred_fallthru
      _
    // Predicated region
    $region34: #{tpu_custom_call.1} parent=1 // pred_check
      _
    $region35: #{tpu_custom_call.1} parent=1 // pred_check_branch
      %304 = sbr.rel (0) target = $region37
    $region36: #{tpu_custom_call.1} parent=1 // pred_region
      %305 = dma.done [#allocation4], 256
    $region37: #{tpu_custom_call.1} parent=1 // pred_fallthru
      _
    // Predicated region
    $region38: #{tpu_custom_call.1} parent=1 // pred_check
      _
    $region39: #{tpu_custom_call.1} parent=1 // pred_check_branch
      %307 = sbr.rel (0) target = $region41
    $region40: #{tpu_custom_call.1} parent=1 // pred_region
      _
    $region41: #{tpu_custom_call.1} parent=1 // pred_fallthru
      _
    // Predicated region
    $region42: #{tpu_custom_call.1} parent=1 // pred_check
      _
    $region43: #{tpu_custom_call.1} parent=1 // pred_check_branch
      %309 = sbr.rel (0) target = $region45
    $region44: #{tpu_custom_call.1} parent=1 // pred_region
      _
    $region45: #{tpu_custom_call.1} parent=1 // pred_fallthru
      _
    %310 = vsyncpa [#allocation3], 1
    %311 = vsyncpa [#allocation4], 1

</llo_original>
